<compile_context>
chip_gen: v6e
topology: v6e:2x2x1
jax: 0.10.0
libtpu: 0.0.40
codegen_flags: <defaults>
</compile_context>

<pallas_src>
import math
import functools

import jax
import jax.numpy as jnp
from jax.experimental import pallas as pl
from jax.experimental.pallas import tpu as pltpu


def _bert_intermediate_kernel(x_ref, w_ref, b_ref, o_ref):
    # x_ref: [tm, H]   w_ref: [H, tn]   b_ref: [1, tn]   o_ref: [tm, tn]
    # Operands go to the MXU in their stored dtype; accumulate in f32.
    y = jnp.dot(x_ref[...], w_ref[...], preferred_element_type=jnp.float32)
    y = y + b_ref[...].astype(jnp.float32)
    # Exact BERT GELU: x * 0.5 * (1 + erf(x / sqrt(2)))
    y = y * 0.5 * (1.0 + jax.lax.erf(y * jnp.float32(1.0 / math.sqrt(2.0))))
    o_ref[...] = y.astype(o_ref.dtype)


def _vmem_capacity_bytes():
    """Per-core VMEM capacity; conservative 64 MiB (v7x) fallback."""
    try:
        get_info = getattr(pltpu, "get_tpu_info", None)
        if get_info is not None:
            cap = getattr(get_info(), "vmem_capacity_bytes", None)
            if cap:
                return int(cap)
    except Exception:
        pass
    return 64 * 1024 * 1024


@functools.partial(
    jax.jit, static_argnames=("tm", "tn", "mxu_dtype_name", "vmem_limit_bytes"))
def _forward(hidden_states, weight_t, bias, *, tm, tn, mxu_dtype_name,
             vmem_limit_bytes):
    B, S, H = hidden_states.shape
    _, I = weight_t.shape
    M = B * S

    x2d = hidden_states.reshape(M, H)
    w2d = weight_t
    if mxu_dtype_name is not None:
        mxu_dtype = jnp.dtype(mxu_dtype_name)
        x2d = x2d.astype(mxu_dtype)
        w2d = w2d.astype(mxu_dtype)
    b2d = bias.reshape(1, I)  # keep 2-D for TPU layout

    n_m = pl.cdiv(M, tm)
    n_n = pl.cdiv(I, tn)
    grid = (n_m, n_n)  # M leading -> megacore shards M-tiles across TCs (v7x)

    x_isize = jnp.dtype(x2d.dtype).itemsize
    w_isize = jnp.dtype(w2d.dtype).itemsize
    b_isize = jnp.dtype(b2d.dtype).itemsize
    o_isize = jnp.dtype(hidden_states.dtype).itemsize
    # With tn == I (common case) the weight block index is constant -> streamed
    # exactly once; otherwise it is re-streamed once per M-tile.
    w_streams = 1 if n_n == 1 else n_m
    cost = pl.CostEstimate(
        flops=2 * M * H * I,
        transcendentals=M * I,  # one erf per output element
        bytes_accessed=(M * H * x_isize + H * I * w_isize * w_streams
                        + I * b_isize + M * I * o_isize),
    )

    # TODO(synk): if DMA is still marginally exposed after retiling, bump the
    # x/weight in_specs to pipeline_mode=pl.Buffered(3) (check v7x VMEM first).
    out2d = pl.pallas_call(
        _bert_intermediate_kernel,
        out_shape=jax.ShapeDtypeStruct((M, I), hidden_states.dtype),
        grid_spec=pltpu.PrefetchScalarGridSpec(
            num_scalar_prefetch=0,
            grid=grid,
            in_specs=[
                pl.BlockSpec((tm, H), lambda i, j: (i, 0)),   # activations
                pl.BlockSpec((H, tn), lambda i, j: (0, j)),   # weight (resident if n_n==1)
                pl.BlockSpec((1, tn), lambda i, j: (0, j)),   # bias
            ],
            out_specs=pl.BlockSpec((tm, tn), lambda i, j: (i, j)),
        ),
        compiler_params=pltpu.CompilerParams(
            dimension_semantics=("parallel", "parallel"),
            vmem_limit_bytes=vmem_limit_bytes,
        ),
        cost_estimate=cost,
    )(x2d, w2d, b2d)

    # TODO(synk): if H ever needs tiling (H >= 4096 models), add a third
    # "arbitrary" grid axis with an f32 VMEM accumulator + pl.when init/finalize.
    return out2d.reshape(B, S, I)


def bert_intermediate(hidden_states, weight_t, bias, *, tm=None, tn=None,
                      mxu_dtype=None):
    """BertIntermediate forward: GELU(hidden_states @ W^T + b).

    hidden_states: [B, S, H]
    weight_t:      [H, I]  -- the nn.Linear weight pre-transposed ONCE at init.
    bias:          [I]
    mxu_dtype:     optional dtype (e.g. jnp.bfloat16) to feed the MXU with;
                   accumulation / bias / GELU stay f32.  None = exact numerics.
    """
    B, S, H = hidden_states.shape
    Hw, I = weight_t.shape
    assert Hw == H, "weight_t must be the [H, I] transpose of the nn.Linear weight"
    M = B * S

    if mxu_dtype is not None:
        in_isize = jnp.dtype(mxu_dtype).itemsize
    else:
        in_isize = jnp.dtype(hidden_states.dtype).itemsize
    x_isize = in_isize
    w_isize = in_isize if mxu_dtype is not None else jnp.dtype(weight_t.dtype).itemsize
    b_isize = jnp.dtype(bias.dtype).itemsize
    o_isize = jnp.dtype(hidden_states.dtype).itemsize

    # --- M tile: large to amortize per-step overhead; clamp / align to 8. ---
    if tm is None:
        tm = 512
    tm = min(tm, M)
    if tm < M:
        tm = max(8, (tm // 8) * 8)

    # --- N tile: keep the full weight resident in VMEM when it fits. ---
    cap = _vmem_capacity_bytes()
    budget = int(cap * 0.75)  # headroom for Mosaic internal scratch

    def tile_bytes(tm_, tn_):
        # Double-buffered input/output tiles.
        return (2 * tm_ * H * x_isize + 2 * H * tn_ * w_isize
                + 2 * tn_ * b_isize + 2 * tm_ * tn_ * o_isize)

    if tn is None:
        if tile_bytes(tm, I) <= budget:
            tn = I  # full weight resident: HBM-streamed exactly once
        else:
            # Fallback (e.g. f32 BERT-large on v7x's 64 MiB VMEM): cap tn.
            avail = budget - 2 * tm * H * x_isize
            denom = 2 * (H * w_isize + b_isize + tm * o_isize)
            tn_cap = avail // denom if avail > 0 else 128
            tn = min(I, max(128, (tn_cap // 128) * 128))
    else:
        tn = min(tn, I)
        if tn < I:
            tn = max(128, (tn // 128) * 128)

    vmem_limit = int(min(cap, max(32 * 1024 * 1024,
                                  tile_bytes(tm, tn) + 8 * 1024 * 1024)))

    mxu_dtype_name = jnp.dtype(mxu_dtype).name if mxu_dtype is not None else None
    return _forward(hidden_states, weight_t, bias, tm=int(tm), tn=int(tn),
                    mxu_dtype_name=mxu_dtype_name, vmem_limit_bytes=vmem_limit)


def _reference(hidden_states, weight, bias):
    # weight in PyTorch nn.Linear layout [I, H]
    y = jnp.einsum("bsh,ih->bsi", hidden_states, weight) + bias
    return y * 0.5 * (1.0 + jax.lax.erf(y / jnp.sqrt(2.0)))


if __name__ == "__main__":
    key = jax.random.PRNGKey(0)
    k_x, k_w, k_b, k_x2, k_w2, k_b2 = jax.random.split(key, 6)

    # Small config consistent with the module: hidden_size=32, intermediate=64.
    B, S, H, I = 2, 8, 32, 64
    hidden_states = jax.random.normal(k_x, (B, S, H), dtype=jnp.float32)
    weight = jax.random.normal(k_w, (I, H), dtype=jnp.float32) * 0.02  # nn.Linear [out, in]
    bias = jax.random.normal(k_b, (I,), dtype=jnp.float32) * 0.02

    # Pre-transpose the weight ONCE (parameter layout [H, I]) — not per call.
    weight_t = jnp.asarray(weight.T)

    # 1) Default path (weight resident, exact f32 numerics).
    out = jax.block_until_ready(bert_intermediate(hidden_states, weight_t, bias))
    ref = _reference(hidden_states, weight, bias)
    assert out.shape == (B, S, I)
    assert jnp.allclose(out, ref, atol=1e-5, rtol=1e-5), "mismatch vs reference"

    # 2) Forced small tiles: exercises tail blocks on both grid axes and the
    #    tn < I (weight re-stream) fallback path (M=144/tm=128, I=192/tn=128).
    B2, S2, H2, I2 = 2, 72, 32, 192
    x2 = jax.random.normal(k_x2, (B2, S2, H2), dtype=jnp.float32)
    w2 = jax.random.normal(k_w2, (I2, H2), dtype=jnp.float32) * 0.02
    b2 = jax.random.normal(k_b2, (I2,), dtype=jnp.float32) * 0.02
    out2 = jax.block_until_ready(
        bert_intermediate(x2, jnp.asarray(w2.T), b2, tm=128, tn=128))
    ref2 = _reference(x2, w2, b2)
    assert out2.shape == (B2, S2, I2)
    assert jnp.allclose(out2, ref2, atol=1e-5, rtol=1e-5), "tiled-path mismatch"

    # 3) bf16-fed MXU path (v5e/v6e perf recommendation); looser tolerance.
    out3 = jax.block_until_ready(
        bert_intermediate(hidden_states, weight_t, bias, mxu_dtype=jnp.bfloat16))
    assert out3.shape == (B, S, I)
    assert jnp.allclose(out3, ref, atol=5e-2, rtol=5e-2), "bf16-path mismatch"

    print("KERNEL_OK")
</pallas_src>

<mosaic_0001>
module attributes {stable_mosaic.version = 11 : i64} {
  func.func @_bert_intermediate_kernel(%arg0: i32, %arg1: i32, %arg2: memref<16x32xf32, #tpu.memory_space<vmem>>, %arg3: memref<32x64xf32, #tpu.memory_space<vmem>>, %arg4: memref<1x64xf32, #tpu.memory_space<vmem>>, %arg5: memref<16x64xf32, #tpu.memory_space<vmem>>) attributes {dimension_semantics = [#tpu.dimension_semantics<parallel>, #tpu.dimension_semantics<parallel>], iteration_bounds = array<i64: 1, 1>, scalar_prefetch = 0 : i64, scratch_operands = 0 : i64, tpu.core_type = #tpu.core_type<tc>, window_params = [{transform_indices = @transform_0, window_bounds = array<i64: 16, 32>}, {transform_indices = @transform_1, window_bounds = array<i64: 32, 64>}, {transform_indices = @transform_2, window_bounds = array<i64: 1, 64>}, {transform_indices = @transform_3, window_bounds = array<i64: 16, 64>}]} {
    %c0 = arith.constant 0 : index
    %c0_0 = arith.constant 0 : index
    %0 = vector.load %arg2[%c0, %c0_0] : memref<16x32xf32, #tpu.memory_space<vmem>>, vector<16x32xf32>
    %c0_1 = arith.constant 0 : index
    %c0_2 = arith.constant 0 : index
    %1 = vector.load %arg3[%c0_1, %c0_2] : memref<32x64xf32, #tpu.memory_space<vmem>>, vector<32x64xf32>
    %cst = arith.constant dense<0.000000e+00> : vector<16x64xf32>
    %2 = tpu.matmul %0, %1, %cst {dimension_numbers = #tpu.dot_dimension_numbers<[1], [0], [0], [1], [0, 0, 1, 1], [], []>} : vector<16x32xf32>, vector<32x64xf32>, vector<16x64xf32> -> vector<16x64xf32>
    %c0_3 = arith.constant 0 : index
    %c0_4 = arith.constant 0 : index
    %3 = vector.load %arg4[%c0_3, %c0_4] : memref<1x64xf32, #tpu.memory_space<vmem>>, vector<1x64xf32>
    %4 = vector.broadcast %3 : vector<1x64xf32> to vector<16x64xf32>
    %5 = arith.addf %2, %4 : vector<16x64xf32>
    %cst_5 = arith.constant 5.000000e-01 : f32
    %6 = vector.broadcast %cst_5 : f32 to vector<16x64xf32>
    %7 = arith.mulf %5, %6 : vector<16x64xf32>
    %cst_6 = arith.constant 0.707106769 : f32
    %8 = vector.broadcast %cst_6 : f32 to vector<16x64xf32>
    %9 = arith.mulf %5, %8 : vector<16x64xf32>
    %10 = math.erf %9 : vector<16x64xf32>
    %cst_7 = arith.constant 1.000000e+00 : f32
    %11 = vector.broadcast %cst_7 : f32 to vector<16x64xf32>
    %12 = arith.addf %11, %10 : vector<16x64xf32>
    %13 = arith.mulf %7, %12 : vector<16x64xf32>
    %c0_8 = arith.constant 0 : index
    %c0_9 = arith.constant 0 : index
    %14 = vector.load %arg5[%c0_8, %c0_9] : memref<16x64xf32, #tpu.memory_space<vmem>>, vector<16x64xf32>
    tpu.vector_store %arg5[%c0_8, %c0_9], %13 {strides = array<i32>} : memref<16x64xf32, #tpu.memory_space<vmem>>, vector<16x64xf32>,
    return
  }
  func.func @transform_0(%arg0: i32, %arg1: i32) -> (i32, i32) {
    %c0_i32 = arith.constant 0 : i32
    %c0_i32_0 = arith.constant 0 : i32
    return %arg0, %c0_i32 : i32, i32
  }
  func.func @transform_1(%arg0: i32, %arg1: i32) -> (i32, i32) {
    %c0_i32 = arith.constant 0 : i32
    %c0_i32_0 = arith.constant 0 : i32
    return %c0_i32, %arg1 : i32, i32
  }
  func.func @transform_2(%arg0: i32, %arg1: i32) -> (i32, i32) {
    %c0_i32 = arith.constant 0 : i32
    %c0_i32_0 = arith.constant 0 : i32
    return %c0_i32, %arg1 : i32, i32
  }
  func.func @transform_3(%arg0: i32, %arg1: i32) -> (i32, i32) {
    %c0_i32 = arith.constant 0 : i32
    return %arg0, %arg1 : i32, i32
  }
}

</mosaic_0001>

<llo_original>
// kernel: _forward.1
$region0: #{_forward.1}
  #allocation0 [shape = 'u32[]', space=smem, size = 0x4, offset = 0x4, fixed_abs, tag = 'smem constant byte address 0x4 - core index']
  #allocation1 [shape = 'u32[144,128]{1,0:T(1,128)}', space=vmem, size = 0x12000, scoped, tag = 'internal scratch']
  %s0 = inlined_call_operand.hbm [shape: f32[16,32], index: 0, kind: input, shape index: {}]
  %s1 = inlined_call_operand.hbm [shape: f32[32,64], index: 1, kind: input, shape index: {}]
  %s2 = inlined_call_operand.vmem [shape: f32[1,64], index: 2, kind: input, shape index: {}]
  %s3 = inlined_call_operand.hbm [shape: f32[16,64], index: 3, kind: output, shape index: {}]
  %s4 = sld [smem:[#allocation0]]
  $region30: #{_forward.1} parent=0
    _
  %s6 = ssub.s32 1, %s4
  %s7 = scalar_select 0, %s6, %s4
  $region1: #{_forward.1} parent=0
    #allocation2 [shape = 'u8[8192]{0}', space=vmem, size = 0x2000, scoped, tag = 'input window, operand 0, single buffered']
    #allocation3 [shape = 's32[1]{0}', space=sflag, size = 0x4, scoped, tag = 'scoped memory for _forward.1']
    #allocation4 [shape = 's32[1]{0}', space=sflag, size = 0x4, scoped, tag = 'scoped memory for _forward.1']
    #allocation5 [shape = 'u8[16384]{0}', space=vmem, size = 0x4000, scoped, tag = 'input window, operand 1, single buffered']
    #allocation6 [shape = 's32[1]{0}', space=sflag, size = 0x4, scoped, tag = 'scoped memory for _forward.1']
    #allocation7 [shape = 'u8[8192]{0}', space=vmem, size = 0x2000, scoped, tag = 'output window, operand 0, single buffered']
    %8 = vsyncpa [#allocation3], 0
    %9 = vsyncpa [#allocation6], 0
    %10 = vsyncpa [#allocation4], 0
    // Predicated region
    $region2: #{_forward.1} parent=1 // pred_check
      _
    $region3: #{_forward.1} parent=1 // pred_check_branch
      %12 = sbr.rel (0) target = $region5
    $region4: #{_forward.1} parent=1 // pred_region
      %s14 = ssub.s32 256, 256
      %15 = vsyncadd [#allocation3], %s14
      %s16 = sshll.u32 [#allocation2], 4
      %s17 = int_to_ptr.vmem [resolvable:$true] %s16
      %22 = dma.hbm_to_vmem [thread:$0]  %s0, 256, %s17, [#allocation3], 128, 128, 8
    $region5: #{_forward.1} parent=1 // pred_fallthru
      _
    // Predicated region
    $region6: #{_forward.1} parent=1 // pred_check
      _
    $region7: #{_forward.1} parent=1 // pred_check_branch
      %24 = sbr.rel (0) target = $region9
    $region8: #{_forward.1} parent=1 // pred_region
      %s26 = ssub.s32 512, 512
      %27 = vsyncadd [#allocation6], %s26
      %s28 = sshll.u32 [#allocation5], 4
      %s29 = int_to_ptr.vmem [resolvable:$true] %s28
      %34 = dma.hbm_to_vmem [thread:$0]  %s1, 512, %s29, [#allocation6], 128, 128, 8
    $region9: #{_forward.1} parent=1 // pred_fallthru
      _
    // Predicated region
    $region10: #{_forward.1} parent=1 // pred_check
      _
    $region11: #{_forward.1} parent=1 // pred_check_branch
      %36 = sbr.rel (0) target = $region13
    $region12: #{_forward.1} parent=1 // pred_region
      _
    $region13: #{_forward.1} parent=1 // pred_fallthru
      _
    // Predicated region
    $region14: #{_forward.1} parent=1 // pred_check
      _
    $region15: #{_forward.1} parent=1 // pred_check_branch
      %38 = sbr.rel (0) target = $region17
    $region16: #{_forward.1} parent=1 // pred_region
      %39 = dma.done [#allocation3], 256
    $region17: #{_forward.1} parent=1 // pred_fallthru
      _
    // Predicated region
    $region18: #{_forward.1} parent=1 // pred_check
      _
    $region19: #{_forward.1} parent=1 // pred_check_branch
      %41 = sbr.rel (0) target = $region21
    $region20: #{_forward.1} parent=1 // pred_region
      %42 = dma.done [#allocation6], 512
    $region21: #{_forward.1} parent=1 // pred_fallthru
      _
    %v43 = vld [vmem:[#allocation2] sm:$0xff]
    %v44 = vld [vmem:[#allocation2 + $0x8] sm:$0xff]
    %v45 = vld [vmem:[#allocation5] sm:$0xff]
    %v46 = vld [vmem:[#allocation5 + $0x8] sm:$0xff]
    %v47 = vld [vmem:[#allocation5 + $0x10] sm:$0xff]
    %v48 = vld [vmem:[#allocation5 + $0x18] sm:$0xff]
    %v49 = vld [vmem:[%s2] sm:$0x1]
    %v51 = vlaneseq
    %v52 = vshrl.u32 %v51, 7
    %v53 = vsub.s32 0, %v52
    %v54 = vrot.slane %v49, %v53
    %vm56 = vcmask 261120
    %v58 = vsel %vm56, %v43, 0
    %v61 = vsel %vm56, %v44, 0
    %63 = vmatprep.subr.mxu0 0.0
    %64 = vmatpush1.msra.mxu0 0.0
    %65 = vmatprep.subr.mxu0 0.0
    %66 = vmatpush1.msra.mxu0 0.0
    %67 = vmatprep.subr.mxu0 0.0
    %68 = vmatpush1.msra.mxu0 0.0
    %69 = vmatprep.subr.mxu0 0.0
    %70 = vmatpush1.msra.mxu0 0.0
    %71 = vmatprep.subr.mxu0 0.0
    %72 = vmatpush1.msra.mxu0 0.0
    %73 = vmatprep.subr.mxu0 0.0
    %74 = vmatpush1.msra.mxu0 0.0
    %75 = vmatprep.subr.mxu0 0.0
    %76 = vmatpush1.msra.mxu0 0.0
    %77 = vmatprep.subr.mxu0 0.0
    %78 = vmatpush1.msra.mxu0 0.0
    %79 = vmatprep.subr.mxu0 0.0
    %80 = vmatpush1.msra.mxu0 0.0
    %81 = vmatprep.subr.mxu0 0.0
    %82 = vmatpush1.msra.mxu0 0.0
    %83 = vmatprep.subr.mxu0 0.0
    %84 = vmatpush1.msra.mxu0 0.0
    %85 = vmatprep.subr.mxu0 0.0
    %86 = vmatpush1.msra.mxu0 0.0
    %87 = vmatprep.subr.mxu0 0.0
    %88 = vmatpush1.msra.mxu0 %v48
    %89 = vmatprep.subr.mxu0 0.0
    %90 = vmatpush1.msra.mxu0 %v47
    %91 = vmatprep.subr.mxu0 0.0
    %92 = vmatpush1.msra.mxu0 %v46
    %93 = vmatprep.subr.mxu0 0.0
    %94 = vmatpush1.msra.mxu0 %v45
    %95 = vmatprep.subr.mxu0 0.0
    %96 = vmatpush2.msra.mxu0 0.0
    %97 = vmatprep.subr.mxu0 0.0
    %98 = vmatpush2.msra.mxu0 0.0
    %99 = vmatprep.subr.mxu0 0.0
    %100 = vmatpush2.msra.mxu0 0.0
    %101 = vmatprep.subr.mxu0 0.0
    %102 = vmatpush2.msra.mxu0 0.0
    %103 = vmatprep.subr.mxu0 0.0
    %104 = vmatpush2.msra.mxu0 0.0
    %105 = vmatprep.subr.mxu0 0.0
    %106 = vmatpush2.msra.mxu0 0.0
    %107 = vmatprep.subr.mxu0 0.0
    %108 = vmatpush2.msra.mxu0 0.0
    %109 = vmatprep.subr.mxu0 0.0
    %110 = vmatpush2.msra.mxu0 0.0
    %111 = vmatprep.subr.mxu0 0.0
    %112 = vmatpush2.msra.mxu0 0.0
    %113 = vmatprep.subr.mxu0 0.0
    %114 = vmatpush2.msra.mxu0 0.0
    %115 = vmatprep.subr.mxu0 0.0
    %116 = vmatpush2.msra.mxu0 0.0
    %117 = vmatprep.subr.mxu0 0.0
    %118 = vmatpush2.msra.mxu0 0.0
    %119 = vmatprep.subr.mxu0 0.0
    %120 = vmatpush2.msra.mxu0 0.0
    %121 = vmatprep.subr.mxu0 0.0
    %122 = vmatpush2.msra.mxu0 0.0
    %123 = vmatprep.subr.mxu0 0.0
    %124 = vmatpush2.msra.mxu0 0.0
    %125 = vmatprep.subr.mxu0 0.0
    %126 = vmatpush2.msra.mxu0 0.0
    %127 = vmatprep.mubr.f32.mxu0 0.0
    %128 = vmatmul.mubr.f32.gmra.mxu0 %v58
    %v129 = vpop.f32.mrf.mxu0
    %v130 = vadd.f32 %v54, %v129
    %v131 = vpop.f32.mrf.mxu0
    %132 = vmatprep.mubr.f32.mxu0 0.0
    %133 = vmatmul.mubr.f32.gmra.mxu0 %v61
    %v134 = vpop.f32.mrf.mxu0
    %v135 = vadd.f32 %v54, %v134
    %v136 = vpop.f32.mrf.mxu0
    %137 = vdwg.mxu0
    %v138 = vmul.f32 %v130, 0.5
    %v139 = vmul.f32 %v135, 0.5
    %v140 = vmul.f32 %v130, 0.70710677
    %v141 = vmul.f32 %v135, 0.70710677
    %v142 = verf.f32.pop %v140
    %v143 = verf.f32.pop %v141
    %v144 = vadd.f32 %v142, 1.0
    %v145 = vadd.f32 %v143, 1.0
    %v146 = vmul.f32 %v138, %v144
    %v147 = vmul.f32 %v139, %v145
    %vm148 = vcmask 523264
    %149 = vst.msk [vmem:[#allocation7] sm:$0xff] %vm148, %v146
    %150 = vst.msk [vmem:[#allocation7 + $0x8] sm:$0xff] %vm148, %v147
    // Predicated region
    $region22: #{_forward.1} parent=1 // pred_check
      _
    $region23: #{_forward.1} parent=1 // pred_check_branch
      %152 = sbr.rel (0) target = $region25
    $region24: #{_forward.1} parent=1 // pred_region
      %s154 = ssub.s32 256, 256
      %155 = vsyncadd [#allocation4], %s154
      %s156 = sshll.u32 [#allocation7], 4
      %s157 = int_to_ptr.vmem [resolvable:$true] %s156
      %162 = dma.vmem_to_hbm [thread:$0]  %s157, 256, %s3, [#allocation4], 128, 128, 8
    $region25: #{_forward.1} parent=1 // pred_fallthru
      _
    // Predicated region
    $region26: #{_forward.1} parent=1 // pred_check
      _
    $region27: #{_forward.1} parent=1 // pred_check_branch
      %164 = sbr.rel (0) target = $region29
    $region28: #{_forward.1} parent=1 // pred_region
      %165 = dma.done [#allocation4], 256
    $region29: #{_forward.1} parent=1 // pred_fallthru
      _
    %166 = vsyncpa [#allocation3], 1
    %167 = vsyncpa [#allocation6], 1
    %168 = vsyncpa [#allocation4], 1

</llo_original>
